<compile_context>
chip_gen: v7x
topology: tpu7x:2x2x1
jax: 0.10.0
libtpu: 0.0.40
codegen_flags: <defaults>
</compile_context>

<pallas_src>
import functools
import math

import jax
import jax.numpy as jnp
from jax.experimental import pallas as pl
from jax.experimental.pallas import tpu as pltpu


def _cdiv(a, b):
    return -(-a // b)


def _round_up(x, m):
    return _cdiv(x, m) * m


def _orthogonal(key, rows, cols, gain):
    """Deterministic (semi-)orthogonal init in the spirit of nn.init.orthogonal_.

    # TODO(synk): not distribution-identical to torch.nn.init.orthogonal_ (QR of an
    # n x n Gaussian sliced vs QR of the (rows, cols) Gaussian); still orthogonal,
    # and the forward pass itself is exact regardless of the init scheme.
    """
    n = max(rows, cols)
    a = jax.random.normal(key, (n, n), dtype=jnp.float32)
    q, r = jnp.linalg.qr(a)
    q = q * jnp.sign(jnp.diag(r))[None, :]
    return gain * q[:rows, :cols]


def value_mlp_kernel(x_ref, w1_ref, b1_ref, w2_ref, b2_ref, w3_ref, b3_ref, o_ref):
    """One batch tile, computed in the batch-on-lanes orientation.

    x_ref  : (tb, input_dim) f32  -- read straight from HBM (no wrapper cast/pad)
    w*_ref : PyTorch [out, in] layout, f32, resident in VMEM across the grid
    b1/b2  : (hidden, 1) columns (broadcast across the lane/batch axis)
    b3_ref : (1,) f32 scalar in SMEM
    o_ref  : (1, tb) f32 lane-dense output row (unmasked full-lane stores)

    All math stays f32 to match the fp32 PyTorch module; at these shapes the
    kernel is step-overhead / HBM bound, not MXU bound.
    """
    x = x_ref[...]                                           # (tb, input_dim) f32

    # Layer 1: h1^T = relu(W1 @ x^T + b1).  NT-form dot (contract last dims of
    # both operands) puts batch on lanes without ever transposing the x tile.
    h = jax.lax.dot_general(
        w1_ref[...], x, (((1,), (1,)), ((), ())),
        preferred_element_type=jnp.float32)                  # (hidden, tb)
    h = jnp.maximum(h + b1_ref[...], 0.0)

    # Layer 2: plain (H, H) @ (H, tb) MXU matmul, everything stays lane-dense.
    h = jnp.dot(w2_ref[...], h, preferred_element_type=jnp.float32)
    h = jnp.maximum(h + b2_ref[...], 0.0)

    # Value head: (1, H) @ (H, tb) -> (1, tb) row (no masked (tb, 1) column store).
    v = jnp.dot(w3_ref[...], h, preferred_element_type=jnp.float32)
    o_ref[...] = v + b3_ref[0]


def _pick_batch_tile(batch, cap):
    """Large VMEM-budgeted batch tile; >= 2 tiles for big batches (v7x megacore)."""
    cap = max(8, (cap // 8) * 8)
    if batch > cap:
        return cap
    if batch >= 512:
        # Split into two tiles so both v7x TensorCores get work; the tile stays a
        # multiple of 8 sublanes, the ragged last block is masked by Pallas.
        return _round_up(_cdiv(batch, 2), 8)
    # Single full-extent tile (block dim == array dim is always a legal block).
    return batch


@functools.partial(jax.jit, static_argnames=("max_batch_tile",))
def value_network_forward(x, w1, b1, w2, b2, w3, b3, *, max_batch_tile=4096):
    """x: [batch, input_dim] f32 -> [batch, 1] f32 (PyTorch ValueNetwork forward)."""
    batch, input_dim = x.shape
    hidden_dim = w1.shape[0]

    # VMEM budget per batch row (f32): double-buffered x tile, h1/h2 temporaries,
    # double-buffered (1, tb) output row.  Weights are tiny and resident.
    per_row_bytes = 4 * (2 * input_dim + 2 * hidden_dim + 2)
    vmem_budget = 6 * 1024 * 1024          # well under v5e's 16 MiB scoped default
    cap = min(max_batch_tile, max(8, (vmem_budget // per_row_bytes) // 8 * 8))
    tb = _pick_batch_tile(batch, cap)
    num_tiles = _cdiv(batch, tb)

    weight_bytes = 4 * (hidden_dim * input_dim + hidden_dim * hidden_dim
                        + 3 * hidden_dim + 1)
    est_vmem = per_row_bytes * tb + 2 * weight_bytes
    vmem_limit = int(min(32 * 1024 * 1024, max(4 * 1024 * 1024, 4 * est_vmem)))

    flops = 2 * batch * (input_dim * hidden_dim + hidden_dim * hidden_dim + hidden_dim)
    bytes_accessed = batch * input_dim * 4 + weight_bytes + num_tiles * tb * 4

    # Lane-dense output slab: row i of (num_tiles, tb) holds values for batch rows
    # [i*tb, (i+1)*tb).  Out-of-bounds rows of a ragged last x block read garbage,
    # which only reaches the corresponding (discarded) output lanes -- rows are
    # fully independent, so do NOT add any cross-row reduction to this kernel.
    out = pl.pallas_call(
        value_mlp_kernel,
        out_shape=jax.ShapeDtypeStruct((num_tiles, tb), jnp.float32),
        grid=(num_tiles,),
        in_specs=[
            pl.BlockSpec((tb, input_dim), lambda i: (i, 0)),            # x tile (pipelined)
            pl.BlockSpec((hidden_dim, input_dim), lambda i: (0, 0)),    # W1 (resident)
            pl.BlockSpec((hidden_dim, 1), lambda i: (0, 0)),            # b1 column
            pl.BlockSpec((hidden_dim, hidden_dim), lambda i: (0, 0)),   # W2 (resident)
            pl.BlockSpec((hidden_dim, 1), lambda i: (0, 0)),            # b2 column
            pl.BlockSpec((1, hidden_dim), lambda i: (0, 0)),            # W3 head row
            pl.BlockSpec(memory_space=pltpu.MemorySpace.SMEM),          # b3 scalar
        ],
        out_specs=pl.BlockSpec((1, tb), lambda i: (i, 0)),
        compiler_params=pltpu.CompilerParams(
            dimension_semantics=("parallel",),
            vmem_limit_bytes=vmem_limit,
        ),
        cost_estimate=pl.CostEstimate(
            flops=flops, transcendentals=0, bytes_accessed=bytes_accessed),
    )(x, w1, b1, w2, b2, w3, b3)

    return out.reshape(num_tiles * tb, 1)[:batch]


def make_params(key, input_dim, hidden_dim):
    """Parameters matching ValueNetwork.__init__ (PyTorch [out, in] weight layout).

    # TODO(synk): n_hidden is fixed at the module default (2); other depths would
    # need an extra fused layer in the kernel body.
    """
    gain = math.sqrt(2.0)
    k1, k2, k3 = jax.random.split(key, 3)
    w1 = _orthogonal(k1, hidden_dim, input_dim, gain)     # [hidden, input]
    w2 = _orthogonal(k2, hidden_dim, hidden_dim, gain)    # [hidden, hidden]
    w3 = _orthogonal(k3, 1, hidden_dim, gain)             # [1, hidden]
    b1 = jnp.zeros((hidden_dim, 1), jnp.float32)          # column (lane-broadcast)
    b2 = jnp.zeros((hidden_dim, 1), jnp.float32)
    b3 = jnp.zeros((1,), jnp.float32)                     # scalar, lives in SMEM
    return w1, b1, w2, b2, w3, b3


def reference_forward(x, w1, b1, w2, b2, w3, b3):
    """Pure-JAX fp32 reference identical to the PyTorch module's forward."""
    hp = jax.lax.Precision.HIGHEST
    h = jnp.maximum(jnp.dot(x, w1.T, precision=hp) + b1.reshape(1, -1), 0.0)
    h = jnp.maximum(jnp.dot(h, w2.T, precision=hp) + b2.reshape(1, -1), 0.0)
    return jnp.dot(h, w3.T, precision=hp) + b3.reshape(1, 1)


if __name__ == "__main__":
    key = jax.random.PRNGKey(0)
    kx, kp, kx2 = jax.random.split(key, 3)

    input_dim, hidden_dim = 16, 32
    params = make_params(kp, input_dim, hidden_dim)

    # Small shape consistent with the module's forward (x: [batch, input_dim]).
    batch = 8
    x = jax.random.normal(kx, (batch, input_dim), dtype=jnp.float32)
    out = jax.block_until_ready(value_network_forward(x, *params))
    ref = reference_forward(x, *params)
    assert out.shape == (batch, 1), out.shape
    assert jnp.allclose(out, ref, atol=1e-3, rtol=1e-3), float(jnp.max(jnp.abs(out - ref)))

    # Larger batch: exercises the 2-tile megacore split and the ragged last tile
    # (1000 rows, tile 504 -> 8 garbage rows masked / discarded).
    big = 1000
    x_big = jax.random.normal(kx2, (big, input_dim), dtype=jnp.float32)
    out_big = jax.block_until_ready(value_network_forward(x_big, *params))
    ref_big = reference_forward(x_big, *params)
    assert out_big.shape == (big, 1), out_big.shape
    assert jnp.allclose(out_big, ref_big, atol=1e-3, rtol=1e-3), float(
        jnp.max(jnp.abs(out_big - ref_big)))

    # Same batch with a small forced tile cap: multi-step pipelined grid (4 tiles).
    out_tiled = jax.block_until_ready(
        value_network_forward(x_big, *params, max_batch_tile=256))
    assert out_tiled.shape == (big, 1), out_tiled.shape
    assert jnp.allclose(out_tiled, ref_big, atol=1e-3, rtol=1e-3), float(
        jnp.max(jnp.abs(out_tiled - ref_big)))

    print("KERNEL_OK")
</pallas_src>

<mosaic_0001>
module attributes {stable_mosaic.version = 11 : i64} {
  func.func @value_mlp_kernel(%arg0: i32, %arg1: memref<8x16xf32, #tpu.memory_space<vmem>>, %arg2: memref<32x16xf32, #tpu.memory_space<vmem>>, %arg3: memref<32x1xf32, #tpu.memory_space<vmem>>, %arg4: memref<32x32xf32, #tpu.memory_space<vmem>>, %arg5: memref<32x1xf32, #tpu.memory_space<vmem>>, %arg6: memref<1x32xf32, #tpu.memory_space<vmem>>, %arg7: memref<1xf32, #tpu.memory_space<smem>>, %arg8: memref<1x8xf32, #tpu.memory_space<vmem>>) attributes {dimension_semantics = [#tpu.dimension_semantics<parallel>], iteration_bounds = array<i64: 1>, scalar_prefetch = 0 : i64, scratch_operands = 0 : i64, tpu.core_type = #tpu.core_type<tc>, window_params = [{transform_indices = @transform_0, window_bounds = array<i64: 8, 16>}, {pipeline_mode = #tpu.pipeline_mode<synchronous>, transform_indices = @transform_1, window_bounds = array<i64: 32, 16>}, {pipeline_mode = #tpu.pipeline_mode<synchronous>, transform_indices = @transform_2, window_bounds = array<i64: 32, 1>}, {pipeline_mode = #tpu.pipeline_mode<synchronous>, transform_indices = @transform_3, window_bounds = array<i64: 32, 32>}, {pipeline_mode = #tpu.pipeline_mode<synchronous>, transform_indices = @transform_4, window_bounds = array<i64: 32, 1>}, {pipeline_mode = #tpu.pipeline_mode<synchronous>, transform_indices = @transform_5, window_bounds = array<i64: 1, 32>}, {transform_indices = @transform_6, window_bounds = array<i64: 1>}, {transform_indices = @transform_7, window_bounds = array<i64: 1, 8>}]} {
    %c0 = arith.constant 0 : index
    %c0_0 = arith.constant 0 : index
    %0 = vector.load %arg1[%c0, %c0_0] : memref<8x16xf32, #tpu.memory_space<vmem>>, vector<8x16xf32>
    %c0_1 = arith.constant 0 : index
    %c0_2 = arith.constant 0 : index
    %1 = vector.load %arg2[%c0_1, %c0_2] : memref<32x16xf32, #tpu.memory_space<vmem>>, vector<32x16xf32>
    %cst = arith.constant dense<0.000000e+00> : vector<32x8xf32>
    %2 = tpu.matmul %1, %0, %cst {dimension_numbers = #tpu.dot_dimension_numbers<[1], [1], [0], [0], [0, 0, 1, 0], [], []>} : vector<32x16xf32>, vector<8x16xf32>, vector<32x8xf32> -> vector<32x8xf32>
    %c0_3 = arith.constant 0 : index
    %c0_4 = arith.constant 0 : index
    %3 = vector.load %arg3[%c0_3, %c0_4] : memref<32x1xf32, #tpu.memory_space<vmem>>, vector<32x1xf32>
    %4 = vector.broadcast %3 : vector<32x1xf32> to vector<32x8xf32>
    %5 = arith.addf %2, %4 : vector<32x8xf32>
    %cst_5 = arith.constant 0.000000e+00 : f32
    %6 = vector.broadcast %cst_5 : f32 to vector<32x8xf32>
    %7 = arith.maximumf %5, %6 : vector<32x8xf32>
    %c0_6 = arith.constant 0 : index
    %c0_7 = arith.constant 0 : index
    %8 = vector.load %arg4[%c0_6, %c0_7] : memref<32x32xf32, #tpu.memory_space<vmem>>, vector<32x32xf32>
    %cst_8 = arith.constant dense<0.000000e+00> : vector<32x8xf32>
    %9 = tpu.matmul %8, %7, %cst_8 {dimension_numbers = #tpu.dot_dimension_numbers<[1], [0], [0], [1], [0, 0, 1, 1], [], []>} : vector<32x32xf32>, vector<32x8xf32>, vector<32x8xf32> -> vector<32x8xf32>
    %c0_9 = arith.constant 0 : index
    %c0_10 = arith.constant 0 : index
    %10 = vector.load %arg5[%c0_9, %c0_10] : memref<32x1xf32, #tpu.memory_space<vmem>>, vector<32x1xf32>
    %11 = vector.broadcast %10 : vector<32x1xf32> to vector<32x8xf32>
    %12 = arith.addf %9, %11 : vector<32x8xf32>
    %cst_11 = arith.constant 0.000000e+00 : f32
    %13 = vector.broadcast %cst_11 : f32 to vector<32x8xf32>
    %14 = arith.maximumf %12, %13 : vector<32x8xf32>
    %c0_12 = arith.constant 0 : index
    %c0_13 = arith.constant 0 : index
    %15 = vector.load %arg6[%c0_12, %c0_13] : memref<1x32xf32, #tpu.memory_space<vmem>>, vector<1x32xf32>
    %cst_14 = arith.constant dense<0.000000e+00> : vector<1x8xf32>
    %16 = tpu.matmul %15, %14, %cst_14 {dimension_numbers = #tpu.dot_dimension_numbers<[1], [0], [0], [1], [0, 0, 1, 1], [], []>} : vector<1x32xf32>, vector<32x8xf32>, vector<1x8xf32> -> vector<1x8xf32>
    %c0_15 = arith.constant 0 : index
    %17 = memref.load %arg7[%c0_15] : memref<1xf32, #tpu.memory_space<smem>>
    %18 = vector.broadcast %17 : f32 to vector<1x8xf32>
    %19 = arith.addf %16, %18 : vector<1x8xf32>
    %c0_16 = arith.constant 0 : index
    %c0_17 = arith.constant 0 : index
    %20 = vector.load %arg8[%c0_16, %c0_17] : memref<1x8xf32, #tpu.memory_space<vmem>>, vector<1x8xf32>
    tpu.vector_store %arg8[%c0_16, %c0_17], %19 {strides = array<i32>} : memref<1x8xf32, #tpu.memory_space<vmem>>, vector<1x8xf32>,
    return
  }
  func.func @transform_0(%arg0: i32) -> (i32, i32) {
    %c0_i32 = arith.constant 0 : i32
    %c0_i32_0 = arith.constant 0 : i32
    return %arg0, %c0_i32 : i32, i32
  }
  func.func @transform_1(%arg0: i32) -> (i32, i32) {
    %c0_i32 = arith.constant 0 : i32
    %c0_i32_0 = arith.constant 0 : i32
    %c0_i32_1 = arith.constant 0 : i32
    return %c0_i32, %c0_i32_0 : i32, i32
  }
  func.func @transform_2(%arg0: i32) -> (i32, i32) {
    %c0_i32 = arith.constant 0 : i32
    %c0_i32_0 = arith.constant 0 : i32
    %c0_i32_1 = arith.constant 0 : i32
    return %c0_i32, %c0_i32_0 : i32, i32
  }
  func.func @transform_3(%arg0: i32) -> (i32, i32) {
    %c0_i32 = arith.constant 0 : i32
    %c0_i32_0 = arith.constant 0 : i32
    %c0_i32_1 = arith.constant 0 : i32
    return %c0_i32, %c0_i32_0 : i32, i32
  }
  func.func @transform_4(%arg0: i32) -> (i32, i32) {
    %c0_i32 = arith.constant 0 : i32
    %c0_i32_0 = arith.constant 0 : i32
    %c0_i32_1 = arith.constant 0 : i32
    return %c0_i32, %c0_i32_0 : i32, i32
  }
  func.func @transform_5(%arg0: i32) -> (i32, i32) {
    %c0_i32 = arith.constant 0 : i32
    %c0_i32_0 = arith.constant 0 : i32
    %c0_i32_1 = arith.constant 0 : i32
    return %c0_i32, %c0_i32_0 : i32, i32
  }
  func.func @transform_6(%arg0: i32) -> i32 {
    %c0_i32 = arith.constant 0 : i32
    %c0_i32_0 = arith.constant 0 : i32
    return %c0_i32 : i32
  }
  func.func @transform_7(%arg0: i32) -> (i32, i32) {
    %c0_i32 = arith.constant 0 : i32
    %c0_i32_0 = arith.constant 0 : i32
    return %arg0, %c0_i32 : i32, i32
  }
}

</mosaic_0001>

<llo_original>
// kernel: value_network_forward.1
$region0: #{value_network_forward.1}
  #allocation0 [shape = 'u32[]', space=smem, size = 0x4, offset = 0x4, fixed_abs, tag = 'smem constant byte address 0x4 - core index']
  #allocation1 [shape = 'u32[144,128]{1,0:T(1,128)}', space=vmem, size = 0x12000, scoped, tag = 'internal scratch']
  #allocation2 [shape = 'f32[1]{0:T(128)S(6)}', space=smem, size = 0x200, scoped, tag = 'scoped memory for value_network_forward.1']
  %s0 = inlined_call_operand.vmem [shape: f32[8,16], index: 0, kind: input, shape index: {}]
  %s1 = inlined_call_operand.vmem [shape: f32[32,16], index: 1, kind: input, shape index: {}]
  %s2 = inlined_call_operand.vmem [shape: f32[32,1], index: 2, kind: input, shape index: {}]
  %s3 = inlined_call_operand.vmem [shape: f32[32,32], index: 3, kind: input, shape index: {}]
  %s4 = inlined_call_operand.vmem [shape: f32[32,1], index: 4, kind: input, shape index: {}]
  %s5 = inlined_call_operand.vmem [shape: f32[1,32], index: 5, kind: input, shape index: {}]
  %s6 = inlined_call_operand.<no memory space> [shape: f32[1], index: 6, kind: input, shape index: {}]
  %s7 = inlined_call_operand.hbm [shape: f32[1,8], index: 7, kind: output, shape index: {}]
  %s8 = sld [smem:[#allocation0]]
  $region38: #{value_network_forward.1} parent=0
    _
  %s10 = ssub.s32 1, %s8
  %s11 = scalar_select 0, %s10, %s8
  %12 = sst [smem:[#allocation2]] %s6
  $region1: #{value_network_forward.1} parent=0
    #allocation3 [shape = 'u8[512]{0}', space=vmem, size = 0x400, scoped, tag = 'output window, operand 0, single buffered']
    #allocation4 [shape = 's32[1]{0}', space=sflag, size = 0x4, scoped, tag = 'scoped memory for value_network_forward.1']
    %13 = vsyncpa [#allocation4], 0
    // Predicated region
    $region2: #{value_network_forward.1} parent=1 // pred_check
      _
    $region3: #{value_network_forward.1} parent=1 // pred_check_branch
      %15 = sbr.rel (0) target = $region5
    $region4: #{value_network_forward.1} parent=1 // pred_region
      _
    $region5: #{value_network_forward.1} parent=1 // pred_fallthru
      _
    // Predicated region
    $region6: #{value_network_forward.1} parent=1 // pred_check
      _
    $region7: #{value_network_forward.1} parent=1 // pred_check_branch
      %17 = sbr.rel (0) target = $region9
    $region8: #{value_network_forward.1} parent=1 // pred_region
      _
    $region9: #{value_network_forward.1} parent=1 // pred_fallthru
      _
    // Predicated region
    $region10: #{value_network_forward.1} parent=1 // pred_check
      _
    $region11: #{value_network_forward.1} parent=1 // pred_check_branch
      %19 = sbr.rel (0) target = $region13
    $region12: #{value_network_forward.1} parent=1 // pred_region
      _
    $region13: #{value_network_forward.1} parent=1 // pred_fallthru
      _
    // Predicated region
    $region14: #{value_network_forward.1} parent=1 // pred_check
      _
    $region15: #{value_network_forward.1} parent=1 // pred_check_branch
      %21 = sbr.rel (0) target = $region17
    $region16: #{value_network_forward.1} parent=1 // pred_region
      _
    $region17: #{value_network_forward.1} parent=1 // pred_fallthru
      _
    // Predicated region
    $region18: #{value_network_forward.1} parent=1 // pred_check
      _
    $region19: #{value_network_forward.1} parent=1 // pred_check_branch
      %23 = sbr.rel (0) target = $region21
    $region20: #{value_network_forward.1} parent=1 // pred_region
      _
    $region21: #{value_network_forward.1} parent=1 // pred_fallthru
      _
    // Predicated region
    $region22: #{value_network_forward.1} parent=1 // pred_check
      _
    $region23: #{value_network_forward.1} parent=1 // pred_check_branch
      %25 = sbr.rel (0) target = $region25
    $region24: #{value_network_forward.1} parent=1 // pred_region
      _
    $region25: #{value_network_forward.1} parent=1 // pred_fallthru
      _
    // Predicated region
    $region26: #{value_network_forward.1} parent=1 // pred_check
      _
    $region27: #{value_network_forward.1} parent=1 // pred_check_branch
      %27 = sbr.rel (0) target = $region29
    $region28: #{value_network_forward.1} parent=1 // pred_region
      _
    $region29: #{value_network_forward.1} parent=1 // pred_fallthru
      _
    %v28 = vld [vmem:[%s0] sm:$0xff]
    %v29 = vld [vmem:[%s1] sm:$0xff]
    %v30 = vld [vmem:[%s1 + $0x8] sm:$0xff]
    %v31 = vld [vmem:[%s1 + $0x10] sm:$0xff]
    %v32 = vld [vmem:[%s1 + $0x18] sm:$0xff]
    %v33 = vld [vmem:[%s2] sm:$0xff]
    %v34 = vld [vmem:[%s2 + $0x8] sm:$0xff]
    %v35 = vld [vmem:[%s2 + $0x10] sm:$0xff]
    %v36 = vld [vmem:[%s2 + $0x18] sm:$0xff]
    %38 = vset.pattern.permute.xlu0 0
    %39 = vperm.xlu0 %38, %v33
    %v40 = vpop.permute.xlu0 %39
    %43 = vset.pattern.permute.xlu0 0
    %44 = vperm.xlu0 %43, %v34
    %v45 = vpop.permute.xlu0 %44
    %48 = vset.pattern.permute.xlu0 0
    %49 = vperm.xlu0 %48, %v35
    %v50 = vpop.permute.xlu0 %49
    %53 = vset.pattern.permute.xlu0 0
    %54 = vperm.xlu0 %53, %v36
    %v55 = vpop.permute.xlu0 %54
    %vm57 = vcmask 130048
    %v59 = vsel %vm57, %v29, 0
    %v62 = vsel %vm57, %v30, 0
    %v65 = vsel %vm57, %v31, 0
    %v68 = vsel %vm57, %v32, 0
    %v71 = vsel %vm57, %v28, 0
    %73 = vmatprep.subr.mxu0 0.0
    %74 = vmatpush1.xpose.msra.mxu0 %v71
    %75 = vmatprep.subr.mxu0 0.0
    %76 = vmatpush1.xpose.msra.mxu0 0.0
    %77 = vmatprep.subr.mxu0 0.0
    %78 = vmatpush1.xpose.msra.mxu0 0.0
    %79 = vmatprep.subr.mxu0 0.0
    %80 = vmatpush1.xpose.msra.mxu0 0.0
    %81 = vmatprep.subr.mxu0 0.0
    %82 = vmatpush1.xpose.msra.mxu0 0.0
    %83 = vmatprep.subr.mxu0 0.0
    %84 = vmatpush1.xpose.msra.mxu0 0.0
    %85 = vmatprep.subr.mxu0 0.0
    %86 = vmatpush1.xpose.msra.mxu0 0.0
    %87 = vmatprep.subr.mxu0 0.0
    %88 = vmatpush1.xpose.msra.mxu0 0.0
    %89 = vmatprep.subr.mxu0 0.0
    %90 = vmatpush1.xpose.msra.mxu0 0.0
    %91 = vmatprep.subr.mxu0 0.0
    %92 = vmatpush1.xpose.msra.mxu0 0.0
    %93 = vmatprep.subr.mxu0 0.0
    %94 = vmatpush1.xpose.msra.mxu0 0.0
    %95 = vmatprep.subr.mxu0 0.0
    %96 = vmatpush1.xpose.msra.mxu0 0.0
    %97 = vmatprep.subr.mxu0 0.0
    %98 = vmatpush1.xpose.msra.mxu0 0.0
    %99 = vmatprep.subr.mxu0 0.0
    %100 = vmatpush1.xpose.msra.mxu0 0.0
    %101 = vmatprep.subr.mxu0 0.0
    %102 = vmatpush1.xpose.msra.mxu0 0.0
    %103 = vmatprep.subr.mxu0 0.0
    %104 = vmatpush1.xpose.msra.mxu0 0.0
    %105 = vmatprep.subr.mxu0 0.0
    %106 = vmatpush1.xpose.msra.mxu0 0.0
    %107 = vmatprep.subr.mxu0 0.0
    %108 = vmatpush1.xpose.msra.mxu0 0.0
    %109 = vmatprep.subr.mxu0 0.0
    %110 = vmatpush1.xpose.msra.mxu0 0.0
    %111 = vmatprep.subr.mxu0 0.0
    %112 = vmatpush1.xpose.msra.mxu0 0.0
    %113 = vmatprep.subr.mxu0 0.0
    %114 = vmatpush1.xpose.msra.mxu0 0.0
    %115 = vmatprep.subr.mxu0 0.0
    %116 = vmatpush1.xpose.msra.mxu0 0.0
    %117 = vmatprep.subr.mxu0 0.0
    %118 = vmatpush1.xpose.msra.mxu0 0.0
    %119 = vmatprep.subr.mxu0 0.0
    %120 = vmatpush1.xpose.msra.mxu0 0.0
    %121 = vmatprep.subr.mxu0 0.0
    %122 = vmatpush1.xpose.msra.mxu0 0.0
    %123 = vmatprep.subr.mxu0 0.0
    %124 = vmatpush1.xpose.msra.mxu0 0.0
    %125 = vmatprep.subr.mxu0 0.0
    %126 = vmatpush1.xpose.msra.mxu0 0.0
    %127 = vmatprep.subr.mxu0 0.0
    %128 = vmatpush1.xpose.msra.mxu0 0.0
    %129 = vmatprep.subr.mxu0 0.0
    %130 = vmatpush1.xpose.msra.mxu0 0.0
    %131 = vmatprep.subr.mxu0 0.0
    %132 = vmatpush1.xpose.msra.mxu0 0.0
    %133 = vmatprep.subr.mxu0 0.0
    %134 = vmatpush1.xpose.msra.mxu0 0.0
    %135 = vmatprep.subr.mxu0 0.0
    %136 = vmatpush1.xpose.msra.mxu0 0.0
    %137 = vmatprep.mubr.f32.mxu0 0.0
    %138 = vmatmul.mubr.f32.gmra.mrb[0].mxu0 %v59
    %v139 = vpop.f32.mrb[0].mxu0
    %v140 = vadd.f32 %v40, %v139
    %v141 = vpop.f32.mrb[0].mxu0
    %142 = vmatprep.mubr.f32.mxu0 0.0
    %143 = vmatmul.mubr.f32.gmra.mrb[0].mxu0 %v62
    %v144 = vpop.f32.mrb[0].mxu0
    %v145 = vadd.f32 %v45, %v144
    %v146 = vpop.f32.mrb[0].mxu0
    %147 = vmatprep.mubr.f32.mxu0 0.0
    %148 = vmatmul.mubr.f32.gmra.mrb[0].mxu0 %v65
    %v149 = vpop.f32.mrb[0].mxu0
    %v150 = vadd.f32 %v50, %v149
    %v151 = vpop.f32.mrb[0].mxu0
    %152 = vmatprep.mubr.f32.mxu0 0.0
    %153 = vmatmul.mubr.f32.gmra.mrb[0].mxu0 %v68
    %v154 = vpop.f32.mrb[0].mxu0
    %v155 = vadd.f32 %v55, %v154
    %v156 = vpop.f32.mrb[0].mxu0
    %157 = vdwg.mxu0
    %v158 = vmax.f32 %v140, 0.0
    %v159 = vmax.f32 %v145, 0.0
    %v160 = vmax.f32 %v150, 0.0
    %v161 = vmax.f32 %v155, 0.0
    %v162 = vld [vmem:[%s3] sm:$0xff]
    %v163 = vld [vmem:[%s3 + $0x8] sm:$0xff]
    %v164 = vld [vmem:[%s3 + $0x10] sm:$0xff]
    %v165 = vld [vmem:[%s3 + $0x18] sm:$0xff]
    %v166 = vld [vmem:[%s4] sm:$0xff]
    %v167 = vld [vmem:[%s4 + $0x8] sm:$0xff]
    %v168 = vld [vmem:[%s4 + $0x10] sm:$0xff]
    %v169 = vld [vmem:[%s4 + $0x18] sm:$0xff]
    %171 = vset.pattern.permute.xlu0 0
    %172 = vperm.xlu0 %171, %v166
    %v173 = vpop.permute.xlu0 %172
    %176 = vset.pattern.permute.xlu0 0
    %177 = vperm.xlu0 %176, %v167
    %v178 = vpop.permute.xlu0 %177
    %181 = vset.pattern.permute.xlu0 0
    %182 = vperm.xlu0 %181, %v168
    %v183 = vpop.permute.xlu0 %182
    %186 = vset.pattern.permute.xlu0 0
    %187 = vperm.xlu0 %186, %v169
    %v188 = vpop.permute.xlu0 %187
    %vm190 = vcmask 261120
    %v192 = vsel %vm190, %v162, 0
    %v195 = vsel %vm190, %v163, 0
    %v198 = vsel %vm190, %v164, 0
    %v201 = vsel %vm190, %v165, 0
    %203 = vmatprep.subr.mxu0 0.0
    %204 = vmatpush1.msra.mxu0 %v158
    %205 = vmatprep.subr.mxu0 0.0
    %206 = vmatpush1.msra.mxu0 %v159
    %207 = vmatprep.subr.mxu0 0.0
    %208 = vmatpush1.msra.mxu0 %v160
    %209 = vmatprep.subr.mxu0 0.0
    %210 = vmatpush1.msra.mxu0 %v161
    %211 = vmatprep.subr.mxu0 0.0
    %212 = vmatpush1.msra.mxu0 0.0
    %213 = vmatprep.subr.mxu0 0.0
    %214 = vmatpush1.msra.mxu0 0.0
    %215 = vmatprep.subr.mxu0 0.0
    %216 = vmatpush1.msra.mxu0 0.0
    %217 = vmatprep.subr.mxu0 0.0
    %218 = vmatpush1.msra.mxu0 0.0
    %219 = vmatprep.subr.mxu0 0.0
    %220 = vmatpush1.msra.mxu0 0.0
    %221 = vmatprep.subr.mxu0 0.0
    %222 = vmatpush1.msra.mxu0 0.0
    %223 = vmatprep.subr.mxu0 0.0
    %224 = vmatpush1.msra.mxu0 0.0
    %225 = vmatprep.subr.mxu0 0.0
    %226 = vmatpush1.msra.mxu0 0.0
    %227 = vmatprep.subr.mxu0 0.0
    %228 = vmatpush1.msra.mxu0 0.0
    %229 = vmatprep.subr.mxu0 0.0
    %230 = vmatpush1.msra.mxu0 0.0
    %231 = vmatprep.subr.mxu0 0.0
    %232 = vmatpush1.msra.mxu0 0.0
    %233 = vmatprep.subr.mxu0 0.0
    %234 = vmatpush1.msra.mxu0 0.0
    %235 = vmatprep.subr.mxu0 0.0
    %236 = vmatpush1.msra.mxu0 0.0
    %237 = vmatprep.subr.mxu0 0.0
    %238 = vmatpush1.msra.mxu0 0.0
    %239 = vmatprep.subr.mxu0 0.0
    %240 = vmatpush1.msra.mxu0 0.0
    %241 = vmatprep.subr.mxu0 0.0
    %242 = vmatpush1.msra.mxu0 0.0
    %243 = vmatprep.subr.mxu0 0.0
    %244 = vmatpush1.msra.mxu0 0.0
    %245 = vmatprep.subr.mxu0 0.0
    %246 = vmatpush1.msra.mxu0 0.0
    %247 = vmatprep.subr.mxu0 0.0
    %248 = vmatpush1.msra.mxu0 0.0
    %249 = vmatprep.subr.mxu0 0.0
    %250 = vmatpush1.msra.mxu0 0.0
    %251 = vmatprep.subr.mxu0 0.0
    %252 = vmatpush1.msra.mxu0 0.0
    %253 = vmatprep.subr.mxu0 0.0
    %254 = vmatpush1.msra.mxu0 0.0
    %255 = vmatprep.subr.mxu0 0.0
    %256 = vmatpush1.msra.mxu0 0.0
    %257 = vmatprep.subr.mxu0 0.0
    %258 = vmatpush1.msra.mxu0 0.0
    %259 = vmatprep.subr.mxu0 0.0
    %260 = vmatpush1.msra.mxu0 0.0
    %261 = vmatprep.subr.mxu0 0.0
    %262 = vmatpush1.msra.mxu0 0.0
    %263 = vmatprep.subr.mxu0 0.0
    %264 = vmatpush1.msra.mxu0 0.0
    %265 = vmatprep.subr.mxu0 0.0
    %266 = vmatpush1.msra.mxu0 0.0
    %267 = vmatprep.mubr.f32.mxu0 0.0
    %268 = vmatmul.mubr.f32.gmra.mrb[0].mxu0 %v192
    %v269 = vpop.f32.mrb[0].mxu0
    %v270 = vadd.f32 %v173, %v269
    %v271 = vpop.f32.mrb[0].mxu0
    %272 = vmatprep.mubr.f32.mxu0 0.0
    %273 = vmatmul.mubr.f32.gmra.mrb[0].mxu0 %v195
    %v274 = vpop.f32.mrb[0].mxu0
    %v275 = vadd.f32 %v178, %v274
    %v276 = vpop.f32.mrb[0].mxu0
    %277 = vmatprep.mubr.f32.mxu0 0.0
    %278 = vmatmul.mubr.f32.gmra.mrb[0].mxu0 %v198
    %v279 = vpop.f32.mrb[0].mxu0
    %v280 = vadd.f32 %v183, %v279
    %v281 = vpop.f32.mrb[0].mxu0
    %282 = vmatprep.mubr.f32.mxu0 0.0
    %283 = vmatmul.mubr.f32.gmra.mrb[0].mxu0 %v201
    %v284 = vpop.f32.mrb[0].mxu0
    %v285 = vadd.f32 %v188, %v284
    %v286 = vpop.f32.mrb[0].mxu0
    %287 = vdwg.mxu0
    %v288 = vmax.f32 %v270, 0.0
    %v289 = vmax.f32 %v275, 0.0
    %v290 = vmax.f32 %v280, 0.0
    %v291 = vmax.f32 %v285, 0.0
    %v292 = vld [vmem:[%s5] sm:$0x1]
    %s293 = sld [smem:[#allocation2]]
    %v294 = vstv %s293
    %v296 = vsel %vm190, %v292, 0
    %298 = vmatprep.subr.mxu0 0.0
    %299 = vmatpush1.msra.mxu0 %v288
    %300 = vmatprep.subr.mxu0 0.0
    %301 = vmatpush1.msra.mxu0 %v289
    %302 = vmatprep.subr.mxu0 0.0
    %303 = vmatpush1.msra.mxu0 %v290
    %304 = vmatprep.subr.mxu0 0.0
    %305 = vmatpush1.msra.mxu0 %v291
    %306 = vmatprep.subr.mxu0 0.0
    %307 = vmatpush1.msra.mxu0 0.0
    %308 = vmatprep.subr.mxu0 0.0
    %309 = vmatpush1.msra.mxu0 0.0
    %310 = vmatprep.subr.mxu0 0.0
    %311 = vmatpush1.msra.mxu0 0.0
    %312 = vmatprep.subr.mxu0 0.0
    %313 = vmatpush1.msra.mxu0 0.0
    %314 = vmatprep.subr.mxu0 0.0
    %315 = vmatpush1.msra.mxu0 0.0
    %316 = vmatprep.subr.mxu0 0.0
    %317 = vmatpush1.msra.mxu0 0.0
    %318 = vmatprep.subr.mxu0 0.0
    %319 = vmatpush1.msra.mxu0 0.0
    %320 = vmatprep.subr.mxu0 0.0
    %321 = vmatpush1.msra.mxu0 0.0
    %322 = vmatprep.subr.mxu0 0.0
    %323 = vmatpush1.msra.mxu0 0.0
    %324 = vmatprep.subr.mxu0 0.0
    %325 = vmatpush1.msra.mxu0 0.0
    %326 = vmatprep.subr.mxu0 0.0
    %327 = vmatpush1.msra.mxu0 0.0
    %328 = vmatprep.subr.mxu0 0.0
    %329 = vmatpush1.msra.mxu0 0.0
    %330 = vmatprep.subr.mxu0 0.0
    %331 = vmatpush1.msra.mxu0 0.0
    %332 = vmatprep.subr.mxu0 0.0
    %333 = vmatpush1.msra.mxu0 0.0
    %334 = vmatprep.subr.mxu0 0.0
    %335 = vmatpush1.msra.mxu0 0.0
    %336 = vmatprep.subr.mxu0 0.0
    %337 = vmatpush1.msra.mxu0 0.0
    %338 = vmatprep.subr.mxu0 0.0
    %339 = vmatpush1.msra.mxu0 0.0
    %340 = vmatprep.subr.mxu0 0.0
    %341 = vmatpush1.msra.mxu0 0.0
    %342 = vmatprep.subr.mxu0 0.0
    %343 = vmatpush1.msra.mxu0 0.0
    %344 = vmatprep.subr.mxu0 0.0
    %345 = vmatpush1.msra.mxu0 0.0
    %346 = vmatprep.subr.mxu0 0.0
    %347 = vmatpush1.msra.mxu0 0.0
    %348 = vmatprep.subr.mxu0 0.0
    %349 = vmatpush1.msra.mxu0 0.0
    %350 = vmatprep.subr.mxu0 0.0
    %351 = vmatpush1.msra.mxu0 0.0
    %352 = vmatprep.subr.mxu0 0.0
    %353 = vmatpush1.msra.mxu0 0.0
    %354 = vmatprep.subr.mxu0 0.0
    %355 = vmatpush1.msra.mxu0 0.0
    %356 = vmatprep.subr.mxu0 0.0
    %357 = vmatpush1.msra.mxu0 0.0
    %358 = vmatprep.subr.mxu0 0.0
    %359 = vmatpush1.msra.mxu0 0.0
    %360 = vmatprep.subr.mxu0 0.0
    %361 = vmatpush1.msra.mxu0 0.0
    %362 = vmatprep.mubr.f32.mxu0 0.0
    %363 = vmatmul.mubr.f32.gmra.mrb[0].mxu0 %v296
    %v364 = vpop.f32.mrb[0].mxu0
    %v365 = vadd.f32 %v294, %v364
    %v366 = vpop.f32.mrb[0].mxu0
    %367 = vdwg.mxu0
    %vm368 = vcmask 57344
    %369 = vst.msk [vmem:[#allocation3] sm:$0x1] %vm368, %v365
    // Predicated region
    $region30: #{value_network_forward.1} parent=1 // pred_check
      _
    $region31: #{value_network_forward.1} parent=1 // pred_check_branch
      %371 = sbr.rel (0) target = $region33
    $region32: #{value_network_forward.1} parent=1 // pred_region
      %s373 = ssub.s32 16, 16
      %374 = vsyncadd [#allocation4], %s373
      %s376 = sshll.u32 [#allocation3], 4
      %s377 = int_to_ptr.vmem [resolvable:$true] %s376
      %379 = dma.vmem_to_hbm [thread:$0]  %s377, 16, %s7, [#allocation4]
    $region33: #{value_network_forward.1} parent=1 // pred_fallthru
      _
    // Predicated region
    $region34: #{value_network_forward.1} parent=1 // pred_check
      _
    $region35: #{value_network_forward.1} parent=1 // pred_check_branch
      %381 = sbr.rel (0) target = $region37
    $region36: #{value_network_forward.1} parent=1 // pred_region
      %382 = dma.done [#allocation4], 16
    $region37: #{value_network_forward.1} parent=1 // pred_fallthru
      _
    %383 = vsyncpa [#allocation4], 1

</llo_original>
